<compile_context>
chip_gen: v7x
topology: tpu7x:2x2x1
jax: 0.10.0
libtpu: 0.0.40
codegen_flags: <defaults>
</compile_context>

<pallas_src>
import functools

import jax
import jax.numpy as jnp
from jax.experimental import pallas as pl
from jax.experimental.pallas import tpu as pltpu


def _round_up(x, m):
    return ((x + m - 1) // m) * m


def _vmem_budget():
    """(tile-picking budget, vmem_limit_bytes) derived from the chip's VMEM."""
    try:
        cap = int(pltpu.get_tpu_info().vmem_capacity_bytes)
    except Exception:
        cap = 0
    if cap <= 0:
        cap = 64 * 1024 * 1024          # conservative (v7x-sized) fallback
    return int(cap * 0.60), int(cap * 0.75)


def _pick_hidden_block(hid_p, target=512):
    """Largest hidden-chunk width <= target that divides hid_p (hid_p % 128 == 0)."""
    if hid_p <= target:
        return hid_p
    for t in (512, 384, 256, 128):
        if t <= target and hid_p % t == 0:
            return t
    return 128


def _pick_tm(B, in_dim, out_p, t_hid, io_bytes, static_bytes, budget, tm_max=1024):
    """Largest MXU-friendly batch tile whose VMEM footprint fits the budget."""
    sub = 8 * max(1, 4 // io_bytes)          # sublane multiple: f32->8, bf16->16, i8->32
    b_ceil = _round_up(B, sub)

    def fits(tm):
        per_tile = (io_bytes * (2 * tm * in_dim + 2 * tm * out_p)   # x / out double-buffered
                    + 4 * tm * out_p                                # f32 accumulator scratch
                    + 2 * 4 * tm * t_hid)                           # live f32 hidden chunk(s)
        return static_bytes + per_tile <= budget

    if b_ceil >= 256:
        align = 256                          # full MXU passes on v6e/v7x (2x128 on v5e)
        cap = (b_ceil // align) * align
    else:
        align = sub
        cap = b_ceil
    cap = min(cap, tm_max)
    if b_ceil >= 2 * align:                  # >=2 batch tiles so v7x's two TCs both work
        cap = min(cap, _round_up(pl.cdiv(b_ceil, 2), align))

    cands = list(range(cap, 0, -align))
    if align > sub:
        cands += list(range(align - sub, 0, -sub))
    for tm in cands:
        if fits(tm):
            return tm
    return sub


def _make_resident_kernel(t_hid, n_chunks):
    """Weights VMEM-resident; loop over hidden chunks, f32-accumulate in scratch."""
    def kernel(x_ref, w1_ref, b1_ref, w2_ref, b2_ref, o_ref, acc_ref):
        x = x_ref[...]
        acc_ref[...] = jnp.zeros_like(acc_ref)
        for c in range(n_chunks):                       # static trip count (unrolled)
            lo = c * t_hid
            h = jnp.dot(x, w1_ref[:, lo:lo + t_hid],
                        preferred_element_type=jnp.float32)
            h = jnp.maximum(h + b1_ref[:, lo:lo + t_hid].astype(jnp.float32), 0.0)
            acc_ref[...] += jnp.dot(h.astype(w2_ref.dtype), w2_ref[lo:lo + t_hid, :],
                                    preferred_element_type=jnp.float32)
        o_ref[...] = (acc_ref[...] + b2_ref[...].astype(jnp.float32)).astype(o_ref.dtype)
    return kernel


def _streamed_kernel(x_ref, w1_ref, b1_ref, w2_ref, b2_ref, o_ref, acc_ref):
    """Hidden dim tiled on an 'arbitrary' grid axis; w1/w2 chunks streamed from HBM."""
    k = pl.program_id(1)

    @pl.when(k == 0)
    def _():
        acc_ref[...] = jnp.zeros_like(acc_ref)

    h = jnp.dot(x_ref[...], w1_ref[...], preferred_element_type=jnp.float32)
    h = jnp.maximum(h + b1_ref[...].astype(jnp.float32), 0.0)
    acc_ref[...] += jnp.dot(h.astype(w2_ref.dtype), w2_ref[...],
                            preferred_element_type=jnp.float32)

    @pl.when(k == pl.num_programs(1) - 1)
    def _():
        o_ref[...] = (acc_ref[...] + b2_ref[...].astype(jnp.float32)).astype(o_ref.dtype)


def prepare_mlp_params(w1, b1, w2, b2):
    """One-time lane-dense padding of hidden/output dims (multiples of 128).
    Done at init, NOT per forward call. Zero padding is mathematically inert.
    w1: (in, hid), b1: (hid,)/(1,hid), w2: (hid, out), b2: (out,)/(1,out)."""
    in_dim, hid_dim = w1.shape
    out_dim = w2.shape[1]
    hid_p = _round_up(hid_dim, 128)
    out_p = _round_up(out_dim, 128)
    w1_p = jnp.pad(w1, ((0, 0), (0, hid_p - hid_dim)))
    b1_p = jnp.pad(jnp.reshape(b1, (1, -1)), ((0, 0), (0, hid_p - hid_dim)))
    w2_p = jnp.pad(w2, ((0, hid_p - hid_dim), (0, out_p - out_dim)))
    b2_p = jnp.pad(jnp.reshape(b2, (1, -1)), ((0, 0), (0, out_p - out_dim)))
    return w1_p, b1_p, w2_p, b2_p, out_dim


@functools.partial(jax.jit, static_argnames=("out_dim", "force_streamed", "hidden_block"))
def mlp_encoder(x, w1_p, b1_p, w2_p, b2_p, out_dim, force_streamed=False,
                hidden_block=None):
    """Computes relu(x @ w1 + b1) @ w2 + b2 using params from prepare_mlp_params."""
    B, in_dim = x.shape
    hid_p = w1_p.shape[1]
    out_p = w2_p.shape[1]
    io_bytes = x.dtype.itemsize

    budget, vmem_limit = _vmem_budget()

    # 2x: Pallas double-buffers every input block, even with a constant index_map.
    resident_bytes = 2 * io_bytes * (in_dim * hid_p + hid_p * out_p + hid_p + out_p)
    streamed = bool(force_streamed) or resident_bytes > budget // 2

    if not streamed:
        t_hid = hidden_block or _pick_hidden_block(hid_p)
        tm = _pick_tm(B, in_dim, out_p, t_hid, io_bytes, resident_bytes, budget)
        grid = (pl.cdiv(B, tm),)
        kernel = _make_resident_kernel(t_hid, hid_p // t_hid)
        in_specs = [
            pl.BlockSpec((tm, in_dim), lambda i: (i, 0)),        # x: streamed over batch
            pl.BlockSpec((in_dim, hid_p), lambda i: (0, 0)),     # w1: VMEM-resident
            pl.BlockSpec((1, hid_p), lambda i: (0, 0)),          # b1: VMEM-resident
            pl.BlockSpec((hid_p, out_p), lambda i: (0, 0)),      # w2: VMEM-resident
            pl.BlockSpec((1, out_p), lambda i: (0, 0)),          # b2: VMEM-resident
        ]
        out_specs = pl.BlockSpec((tm, out_p), lambda i: (i, 0))
        dim_sem = ("parallel",)
        weight_passes = 1
    else:
        t_hid = hidden_block or _pick_hidden_block(hid_p)
        chunk_bytes = 2 * io_bytes * (in_dim * t_hid + t_hid * out_p + t_hid + out_p)
        if chunk_bytes > budget // 2 and t_hid > 128:
            t_hid = 128
            chunk_bytes = 2 * io_bytes * (in_dim * t_hid + t_hid * out_p + t_hid + out_p)
        tm = _pick_tm(B, in_dim, out_p, t_hid, io_bytes, chunk_bytes, budget)
        grid = (pl.cdiv(B, tm), hid_p // t_hid)
        kernel = _streamed_kernel
        in_specs = [
            pl.BlockSpec((tm, in_dim), lambda i, k: (i, 0)),     # x: constant along k
            pl.BlockSpec((in_dim, t_hid), lambda i, k: (0, k)),  # w1 chunk streamed
            pl.BlockSpec((1, t_hid), lambda i, k: (0, k)),
            pl.BlockSpec((t_hid, out_p), lambda i, k: (k, 0)),   # w2 chunk streamed
            pl.BlockSpec((1, out_p), lambda i, k: (0, 0)),
        ]
        out_specs = pl.BlockSpec((tm, out_p), lambda i, k: (i, 0))
        dim_sem = ("parallel", "arbitrary")
        weight_passes = grid[0]

    assert hid_p % t_hid == 0 and t_hid % 128 == 0

    flops = 2 * B * (in_dim * hid_p + hid_p * out_p)
    bytes_accessed = io_bytes * (B * in_dim + B * out_p
                                 + weight_passes * (in_dim * hid_p + hid_p * out_p
                                                    + hid_p + out_p))

    out = pl.pallas_call(
        kernel,
        out_shape=jax.ShapeDtypeStruct((B, out_p), x.dtype),
        grid_spec=pltpu.PrefetchScalarGridSpec(
            num_scalar_prefetch=0,
            grid=grid,
            in_specs=in_specs,
            out_specs=out_specs,
            scratch_shapes=[pltpu.VMEM((tm, out_p), jnp.float32)],
        ),
        compiler_params=pltpu.CompilerParams(
            dimension_semantics=dim_sem,
            vmem_limit_bytes=vmem_limit,
        ),
        cost_estimate=pl.CostEstimate(
            flops=flops, transcendentals=0, bytes_accessed=bytes_accessed),
    )(x, w1_p, b1_p, w2_p, b2_p)

    # Only the lane-padding of the output features needs slicing off.
    return out[:, :out_dim]


def init_linear_params(key, in_features, out_features, dtype=jnp.float32):
    """nn.Linear default init U(-1/sqrt(in), 1/sqrt(in)); weight stored (in, out)."""
    k_w, k_b = jax.random.split(key)
    bound = 1.0 / (in_features ** 0.5)
    w = jax.random.uniform(k_w, (in_features, out_features), dtype,
                           minval=-bound, maxval=bound)
    b = jax.random.uniform(k_b, (out_features,), dtype, minval=-bound, maxval=bound)
    return w, b


if __name__ == "__main__":
    key = jax.random.PRNGKey(0)
    k_x, k_l1, k_l2, k_x2, k_l3, k_l4 = jax.random.split(key, 6)

    def reference(x, w1, b1, w2, b2):
        return jnp.maximum(x @ w1 + b1, 0.0) @ w2 + b2

    # Case 1: MLPEncoder(input=16, hidden=32, output=24), batch 8 (resident path).
    B, input_dim, hidden_dim, output_dim = 8, 16, 32, 24
    x = jax.random.normal(k_x, (B, input_dim), jnp.float32)
    w1, b1 = init_linear_params(k_l1, input_dim, hidden_dim)
    w2, b2 = init_linear_params(k_l2, hidden_dim, output_dim)
    w1_p, b1_p, w2_p, b2_p, od = prepare_mlp_params(w1, b1, w2, b2)
    out = jax.block_until_ready(mlp_encoder(x, w1_p, b1_p, w2_p, b2_p, out_dim=od))
    assert out.shape == (B, output_dim)
    assert jnp.allclose(out, reference(x, w1, b1, w2, b2), atol=1e-5, rtol=1e-5)

    # Case 2: odd sizes -> exercises hid/out lane padding, the in-kernel hidden-chunk
    # loop (hid_p=640 -> 5 chunks of 128) and the masked batch boundary tile.
    B2, in2, hid2, out2 = 20, 24, 600, 40
    x2 = jax.random.normal(k_x2, (B2, in2), jnp.float32)
    w1b, b1b = init_linear_params(k_l3, in2, hid2)
    w2b, b2b = init_linear_params(k_l4, hid2, out2)
    w1bp, b1bp, w2bp, b2bp, od2 = prepare_mlp_params(w1b, b1b, w2b, b2b)
    outb = jax.block_until_ready(mlp_encoder(x2, w1bp, b1bp, w2bp, b2bp, out_dim=od2))
    assert outb.shape == (B2, out2)
    assert jnp.allclose(outb, reference(x2, w1b, b1b, w2b, b2b), atol=1e-4, rtol=1e-4)

    # Case 3: force the weight-streaming path (grid-k accumulation) at small size.
    outc = jax.block_until_ready(
        mlp_encoder(x2, w1bp, b1bp, w2bp, b2bp, out_dim=od2,
                    force_streamed=True, hidden_block=128))
    assert jnp.allclose(outc, reference(x2, w1b, b1b, w2b, b2b), atol=1e-4, rtol=1e-4)

    print("KERNEL_OK")
</pallas_src>

<mosaic_0001>
module attributes {stable_mosaic.version = 11 : i64} {
  func.func @kernel(%arg0: i32, %arg1: memref<8x16xf32, #tpu.memory_space<vmem>>, %arg2: memref<16x128xf32, #tpu.memory_space<vmem>>, %arg3: memref<1x128xf32, #tpu.memory_space<vmem>>, %arg4: memref<128x128xf32, #tpu.memory_space<vmem>>, %arg5: memref<1x128xf32, #tpu.memory_space<vmem>>, %arg6: memref<8x128xf32, #tpu.memory_space<vmem>>, %arg7: memref<8x128xf32, #tpu.memory_space<vmem>>) attributes {dimension_semantics = [#tpu.dimension_semantics<parallel>], iteration_bounds = array<i64: 1>, scalar_prefetch = 0 : i64, scratch_operands = 1 : i64, tpu.core_type = #tpu.core_type<tc>, window_params = [{transform_indices = @transform_0, window_bounds = array<i64: 8, 16>}, {pipeline_mode = #tpu.pipeline_mode<synchronous>, transform_indices = @transform_1, window_bounds = array<i64: 16, 128>}, {pipeline_mode = #tpu.pipeline_mode<synchronous>, transform_indices = @transform_2, window_bounds = array<i64: 1, 128>}, {pipeline_mode = #tpu.pipeline_mode<synchronous>, transform_indices = @transform_3, window_bounds = array<i64: 128, 128>}, {pipeline_mode = #tpu.pipeline_mode<synchronous>, transform_indices = @transform_4, window_bounds = array<i64: 1, 128>}, {transform_indices = @transform_5, window_bounds = array<i64: 8, 128>}]} {
    %c0 = arith.constant 0 : index
    %c0_0 = arith.constant 0 : index
    %0 = vector.load %arg1[%c0, %c0_0] : memref<8x16xf32, #tpu.memory_space<vmem>>, vector<8x16xf32>
    %cst = arith.constant 0.000000e+00 : f32
    %1 = vector.broadcast %cst : f32 to vector<8x128xf32>
    %c0_1 = arith.constant 0 : index
    %c0_2 = arith.constant 0 : index
    %2 = vector.load %arg7[%c0_1, %c0_2] : memref<8x128xf32, #tpu.memory_space<vmem>>, vector<8x128xf32>
    tpu.vector_store %arg7[%c0_1, %c0_2], %1 {strides = array<i32>} : memref<8x128xf32, #tpu.memory_space<vmem>>, vector<8x128xf32>,
    %c0_3 = arith.constant 0 : index
    %c0_4 = arith.constant 0 : index
    %3 = vector.load %arg2[%c0_3, %c0_4] : memref<16x128xf32, #tpu.memory_space<vmem>>, vector<16x128xf32>
    %cst_5 = arith.constant dense<0.000000e+00> : vector<8x128xf32>
    %4 = tpu.matmul %0, %3, %cst_5 {dimension_numbers = #tpu.dot_dimension_numbers<[1], [0], [0], [1], [0, 0, 1, 1], [], []>} : vector<8x16xf32>, vector<16x128xf32>, vector<8x128xf32> -> vector<8x128xf32>
    %c0_6 = arith.constant 0 : index
    %c0_7 = arith.constant 0 : index
    %5 = vector.load %arg3[%c0_6, %c0_7] : memref<1x128xf32, #tpu.memory_space<vmem>>, vector<1x128xf32>
    %6 = vector.broadcast %5 : vector<1x128xf32> to vector<8x128xf32>
    %7 = arith.addf %4, %6 : vector<8x128xf32>
    %cst_8 = arith.constant 0.000000e+00 : f32
    %8 = vector.broadcast %cst_8 : f32 to vector<8x128xf32>
    %9 = arith.maximumf %7, %8 : vector<8x128xf32>
    %c0_9 = arith.constant 0 : index
    %c0_10 = arith.constant 0 : index
    %10 = vector.load %arg7[%c0_9, %c0_10] : memref<8x128xf32, #tpu.memory_space<vmem>>, vector<8x128xf32>
    %c0_11 = arith.constant 0 : index
    %c0_12 = arith.constant 0 : index
    %11 = vector.load %arg4[%c0_11, %c0_12] : memref<128x128xf32, #tpu.memory_space<vmem>>, vector<128x128xf32>
    %cst_13 = arith.constant dense<0.000000e+00> : vector<8x128xf32>
    %12 = tpu.matmul %9, %11, %cst_13 {dimension_numbers = #tpu.dot_dimension_numbers<[1], [0], [0], [1], [0, 0, 1, 1], [], []>} : vector<8x128xf32>, vector<128x128xf32>, vector<8x128xf32> -> vector<8x128xf32>
    %13 = arith.addf %10, %12 : vector<8x128xf32>
    %c0_14 = arith.constant 0 : index
    %c0_15 = arith.constant 0 : index
    %14 = vector.load %arg7[%c0_14, %c0_15] : memref<8x128xf32, #tpu.memory_space<vmem>>, vector<8x128xf32>
    tpu.vector_store %arg7[%c0_14, %c0_15], %13 {strides = array<i32>} : memref<8x128xf32, #tpu.memory_space<vmem>>, vector<8x128xf32>,
    %c0_16 = arith.constant 0 : index
    %c0_17 = arith.constant 0 : index
    %15 = vector.load %arg7[%c0_16, %c0_17] : memref<8x128xf32, #tpu.memory_space<vmem>>, vector<8x128xf32>
    %c0_18 = arith.constant 0 : index
    %c0_19 = arith.constant 0 : index
    %16 = vector.load %arg5[%c0_18, %c0_19] : memref<1x128xf32, #tpu.memory_space<vmem>>, vector<1x128xf32>
    %17 = vector.broadcast %16 : vector<1x128xf32> to vector<8x128xf32>
    %18 = arith.addf %15, %17 : vector<8x128xf32>
    %c0_20 = arith.constant 0 : index
    %c0_21 = arith.constant 0 : index
    %19 = vector.load %arg6[%c0_20, %c0_21] : memref<8x128xf32, #tpu.memory_space<vmem>>, vector<8x128xf32>
    tpu.vector_store %arg6[%c0_20, %c0_21], %18 {strides = array<i32>} : memref<8x128xf32, #tpu.memory_space<vmem>>, vector<8x128xf32>,
    return
  }
  func.func @transform_0(%arg0: i32) -> (i32, i32) {
    %c0_i32 = arith.constant 0 : i32
    %c0_i32_0 = arith.constant 0 : i32
    return %arg0, %c0_i32 : i32, i32
  }
  func.func @transform_1(%arg0: i32) -> (i32, i32) {
    %c0_i32 = arith.constant 0 : i32
    %c0_i32_0 = arith.constant 0 : i32
    %c0_i32_1 = arith.constant 0 : i32
    return %c0_i32, %c0_i32_0 : i32, i32
  }
  func.func @transform_2(%arg0: i32) -> (i32, i32) {
    %c0_i32 = arith.constant 0 : i32
    %c0_i32_0 = arith.constant 0 : i32
    %c0_i32_1 = arith.constant 0 : i32
    return %c0_i32, %c0_i32_0 : i32, i32
  }
  func.func @transform_3(%arg0: i32) -> (i32, i32) {
    %c0_i32 = arith.constant 0 : i32
    %c0_i32_0 = arith.constant 0 : i32
    %c0_i32_1 = arith.constant 0 : i32
    return %c0_i32, %c0_i32_0 : i32, i32
  }
  func.func @transform_4(%arg0: i32) -> (i32, i32) {
    %c0_i32 = arith.constant 0 : i32
    %c0_i32_0 = arith.constant 0 : i32
    %c0_i32_1 = arith.constant 0 : i32
    return %c0_i32, %c0_i32_0 : i32, i32
  }
  func.func @transform_5(%arg0: i32) -> (i32, i32) {
    %c0_i32 = arith.constant 0 : i32
    %c0_i32_0 = arith.constant 0 : i32
    return %arg0, %c0_i32 : i32, i32
  }
}

</mosaic_0001>

<llo_original>
// kernel: mlp_encoder.1
$region0: #{mlp_encoder.1}
  #allocation0 [shape = 'u32[]', space=smem, size = 0x4, offset = 0x4, fixed_abs, tag = 'smem constant byte address 0x4 - core index']
  #allocation1 [shape = 'u32[144,128]{1,0:T(1,128)}', space=vmem, size = 0x12000, scoped, tag = 'internal scratch']
  #allocation2 [shape = 'f32[8,128]{1,0:T(8,128)}', space=vmem, size = 0x1000, scoped, tag = 'scratch operand']
  %s0 = inlined_call_operand.hbm [shape: f32[8,16], index: 0, kind: input, shape index: {}]
  %s1 = inlined_call_operand.hbm [shape: f32[16,128], index: 1, kind: input, shape index: {}]
  %s2 = inlined_call_operand.vmem [shape: f32[1,128], index: 2, kind: input, shape index: {}]
  %s3 = inlined_call_operand.hbm [shape: f32[128,128], index: 3, kind: input, shape index: {}]
  %s4 = inlined_call_operand.vmem [shape: f32[1,128], index: 4, kind: input, shape index: {}]
  %s5 = inlined_call_operand.hbm [shape: f32[8,128], index: 5, kind: output, shape index: {}]
  %s6 = sld [smem:[#allocation0]]
  $region42: #{mlp_encoder.1} parent=0
    _
  %s8 = ssub.s32 1, %s6
  %s9 = scalar_select 0, %s8, %s6
  $region1: #{mlp_encoder.1} parent=0
    #allocation3 [shape = 'u8[4096]{0}', space=vmem, size = 0x1000, scoped, tag = 'input window, operand 0, single buffered']
    #allocation4 [shape = 's32[1]{0}', space=sflag, size = 0x4, scoped, tag = 'scoped memory for mlp_encoder.1']
    #allocation5 [shape = 's32[1]{0}', space=sflag, size = 0x4, scoped, tag = 'scoped memory for mlp_encoder.1']
    #allocation6 [shape = 'u8[8192]{0}', space=vmem, size = 0x2000, scoped, tag = 'input window, operand 1, single buffered']
    #allocation7 [shape = 's32[1]{0}', space=sflag, size = 0x4, scoped, tag = 'scoped memory for mlp_encoder.1']
    #allocation8 [shape = 'u8[65536]{0}', space=vmem, size = 0x10000, scoped, tag = 'input window, operand 3, single buffered']
    #allocation9 [shape = 'u8[4096]{0}', space=vmem, size = 0x1000, scoped, tag = 'output window, operand 0, single buffered']
    %10 = vsyncpa [#allocation4], 0
    %11 = vsyncpa [#allocation7], 0
    %12 = vsyncpa [#allocation5], 0
    // Predicated region
    $region2: #{mlp_encoder.1} parent=1 // pred_check
      _
    $region3: #{mlp_encoder.1} parent=1 // pred_check_branch
      %14 = sbr.rel (0) target = $region5
    $region4: #{mlp_encoder.1} parent=1 // pred_region
      %s16 = ssub.s32 128, 128
      %17 = vsyncadd [#allocation4], %s16
      %s19 = sshll.u32 [#allocation3], 4
      %s20 = int_to_ptr.vmem [resolvable:$true] %s19
      %22 = dma.hbm_to_vmem [thread:$0]  %s0, 128, %s20, [#allocation4]
    $region5: #{mlp_encoder.1} parent=1 // pred_fallthru
      _
    // Predicated region
    $region6: #{mlp_encoder.1} parent=1 // pred_check
      _
    $region7: #{mlp_encoder.1} parent=1 // pred_check_branch
      %24 = sbr.rel (0) target = $region9
    $region8: #{mlp_encoder.1} parent=1 // pred_region
      %s26 = ssub.s32 256, 256
      %27 = vsyncadd [#allocation7], %s26
      %s28 = sshll.u32 [#allocation6], 4
      %s29 = int_to_ptr.vmem [resolvable:$true] %s28
      %34 = dma.hbm_to_vmem [thread:$0]  %s1, 256, %s29, [#allocation7], 128, 128, 8
    $region9: #{mlp_encoder.1} parent=1 // pred_fallthru
      _
    // Predicated region
    $region10: #{mlp_encoder.1} parent=1 // pred_check
      _
    $region11: #{mlp_encoder.1} parent=1 // pred_check_branch
      %36 = sbr.rel (0) target = $region13
    $region12: #{mlp_encoder.1} parent=1 // pred_region
      _
    $region13: #{mlp_encoder.1} parent=1 // pred_fallthru
      _
    // Predicated region
    $region14: #{mlp_encoder.1} parent=1 // pred_check
      _
    $region15: #{mlp_encoder.1} parent=1 // pred_check_branch
      %38 = sbr.rel (0) target = $region17
    $region16: #{mlp_encoder.1} parent=1 // pred_region
      %s40 = ssub.s32 2048, 2048
      %41 = vsyncadd [#allocation7], %s40
      %s42 = sshll.u32 [#allocation8], 4
      %s43 = int_to_ptr.vmem [resolvable:$true] %s42
      %48 = dma.hbm_to_vmem [thread:$0]  %s3, 2048, %s43, [#allocation7], 128, 128, 8
    $region17: #{mlp_encoder.1} parent=1 // pred_fallthru
      _
    // Predicated region
    $region18: #{mlp_encoder.1} parent=1 // pred_check
      _
    $region19: #{mlp_encoder.1} parent=1 // pred_check_branch
      %50 = sbr.rel (0) target = $region21
    $region20: #{mlp_encoder.1} parent=1 // pred_region
      _
    $region21: #{mlp_encoder.1} parent=1 // pred_fallthru
      _
    // Predicated region
    $region22: #{mlp_encoder.1} parent=1 // pred_check
      _
    $region23: #{mlp_encoder.1} parent=1 // pred_check_branch
      %52 = sbr.rel (0) target = $region25
    $region24: #{mlp_encoder.1} parent=1 // pred_region
      %53 = dma.done [#allocation4], 128
    $region25: #{mlp_encoder.1} parent=1 // pred_fallthru
      _
    // Predicated region
    $region26: #{mlp_encoder.1} parent=1 // pred_check
      _
    $region27: #{mlp_encoder.1} parent=1 // pred_check_branch
      %55 = sbr.rel (0) target = $region29
    $region28: #{mlp_encoder.1} parent=1 // pred_region
      %56 = dma.done [#allocation7], 256
    $region29: #{mlp_encoder.1} parent=1 // pred_fallthru
      _
    // Predicated region
    $region30: #{mlp_encoder.1} parent=1 // pred_check
      _
    $region31: #{mlp_encoder.1} parent=1 // pred_check_branch
      %58 = sbr.rel (0) target = $region33
    $region32: #{mlp_encoder.1} parent=1 // pred_region
      %59 = dma.done [#allocation7], 2048
    $region33: #{mlp_encoder.1} parent=1 // pred_fallthru
      _
    %v60 = vld [vmem:[#allocation3] sm:$0xff]
    %61 = vst [vmem:[#allocation2] sm:$0xff] 0.0
    %v62 = vld [vmem:[#allocation6] sm:$0xff]
    %v63 = vld [vmem:[#allocation6 + $0x8] sm:$0xff]
    %v64 = vld [vmem:[%s2] sm:$0x1]
    %v66 = vlaneseq
    %v67 = vshrl.u32 %v66, 7
    %v68 = vsub.s32 0, %v67
    %v69 = vrot.slane %v64, %v68
    %vm71 = vcmask 130048
    %v73 = vsel %vm71, %v60, 0
    %75 = vmatprep.subr.mxu0 0.0
    %76 = vmatpush1.msra.mxu0 %v62
    %77 = vmatprep.subr.mxu0 0.0
    %78 = vmatpush1.msra.mxu0 %v63
    %79 = vmatprep.subr.mxu0 0.0
    %80 = vmatpush1.msra.mxu0 0.0
    %81 = vmatprep.subr.mxu0 0.0
    %82 = vmatpush1.msra.mxu0 0.0
    %83 = vmatprep.subr.mxu0 0.0
    %84 = vmatpush1.msra.mxu0 0.0
    %85 = vmatprep.subr.mxu0 0.0
    %86 = vmatpush1.msra.mxu0 0.0
    %87 = vmatprep.subr.mxu0 0.0
    %88 = vmatpush1.msra.mxu0 0.0
    %89 = vmatprep.subr.mxu0 0.0
    %90 = vmatpush1.msra.mxu0 0.0
    %91 = vmatprep.subr.mxu0 0.0
    %92 = vmatpush1.msra.mxu0 0.0
    %93 = vmatprep.subr.mxu0 0.0
    %94 = vmatpush1.msra.mxu0 0.0
    %95 = vmatprep.subr.mxu0 0.0
    %96 = vmatpush1.msra.mxu0 0.0
    %97 = vmatprep.subr.mxu0 0.0
    %98 = vmatpush1.msra.mxu0 0.0
    %99 = vmatprep.subr.mxu0 0.0
    %100 = vmatpush1.msra.mxu0 0.0
    %101 = vmatprep.subr.mxu0 0.0
    %102 = vmatpush1.msra.mxu0 0.0
    %103 = vmatprep.subr.mxu0 0.0
    %104 = vmatpush1.msra.mxu0 0.0
    %105 = vmatprep.subr.mxu0 0.0
    %106 = vmatpush1.msra.mxu0 0.0
    %107 = vmatprep.subr.mxu0 0.0
    %108 = vmatpush1.msra.mxu0 0.0
    %109 = vmatprep.subr.mxu0 0.0
    %110 = vmatpush1.msra.mxu0 0.0
    %111 = vmatprep.subr.mxu0 0.0
    %112 = vmatpush1.msra.mxu0 0.0
    %113 = vmatprep.subr.mxu0 0.0
    %114 = vmatpush1.msra.mxu0 0.0
    %115 = vmatprep.subr.mxu0 0.0
    %116 = vmatpush1.msra.mxu0 0.0
    %117 = vmatprep.subr.mxu0 0.0
    %118 = vmatpush1.msra.mxu0 0.0
    %119 = vmatprep.subr.mxu0 0.0
    %120 = vmatpush1.msra.mxu0 0.0
    %121 = vmatprep.subr.mxu0 0.0
    %122 = vmatpush1.msra.mxu0 0.0
    %123 = vmatprep.subr.mxu0 0.0
    %124 = vmatpush1.msra.mxu0 0.0
    %125 = vmatprep.subr.mxu0 0.0
    %126 = vmatpush1.msra.mxu0 0.0
    %127 = vmatprep.subr.mxu0 0.0
    %128 = vmatpush1.msra.mxu0 0.0
    %129 = vmatprep.subr.mxu0 0.0
    %130 = vmatpush1.msra.mxu0 0.0
    %131 = vmatprep.subr.mxu0 0.0
    %132 = vmatpush1.msra.mxu0 0.0
    %133 = vmatprep.subr.mxu0 0.0
    %134 = vmatpush1.msra.mxu0 0.0
    %135 = vmatprep.subr.mxu0 0.0
    %136 = vmatpush1.msra.mxu0 0.0
    %137 = vmatprep.subr.mxu0 0.0
    %138 = vmatpush1.msra.mxu0 0.0
    %139 = vmatprep.mubr.f32.mxu0 0.0
    %140 = vmatmul.mubr.f32.gmra.mrb[0].mxu0 %v73
    %v141 = vpop.f32.mrb[0].mxu0
    %v142 = vadd.f32 %v69, %v141
    %v143 = vpop.f32.mrb[0].mxu0
    %144 = vdwg.mxu0
    %v145 = vmax.f32 %v142, 0.0
    %v146 = vld [vmem:[#allocation2] sm:$0xff]
    %v147 = vld [vmem:[#allocation8] sm:$0xff]
    %v148 = vld [vmem:[#allocation8 + $0x8] sm:$0xff]
    %v149 = vld [vmem:[#allocation8 + $0x10] sm:$0xff]
    %v150 = vld [vmem:[#allocation8 + $0x18] sm:$0xff]
    %v151 = vld [vmem:[#allocation8 + $0x20] sm:$0xff]
    %v152 = vld [vmem:[#allocation8 + $0x28] sm:$0xff]
    %v153 = vld [vmem:[#allocation8 + $0x30] sm:$0xff]
    %v154 = vld [vmem:[#allocation8 + $0x38] sm:$0xff]
    %v155 = vld [vmem:[#allocation8 + $0x40] sm:$0xff]
    %v156 = vld [vmem:[#allocation8 + $0x48] sm:$0xff]
    %v157 = vld [vmem:[#allocation8 + $0x50] sm:$0xff]
    %v158 = vld [vmem:[#allocation8 + $0x58] sm:$0xff]
    %v159 = vld [vmem:[#allocation8 + $0x60] sm:$0xff]
    %v160 = vld [vmem:[#allocation8 + $0x68] sm:$0xff]
    %v161 = vld [vmem:[#allocation8 + $0x70] sm:$0xff]
    %v162 = vld [vmem:[#allocation8 + $0x78] sm:$0xff]
    %163 = vmatprep.subr.mxu0 0.0
    %164 = vmatpush1.msra.mxu0 %v147
    %165 = vmatprep.subr.mxu0 0.0
    %166 = vmatpush1.msra.mxu0 %v148
    %167 = vmatprep.subr.mxu0 0.0
    %168 = vmatpush1.msra.mxu0 %v149
    %169 = vmatprep.subr.mxu0 0.0
    %170 = vmatpush1.msra.mxu0 %v150
    %171 = vmatprep.subr.mxu0 0.0
    %172 = vmatpush1.msra.mxu0 %v151
    %173 = vmatprep.subr.mxu0 0.0
    %174 = vmatpush1.msra.mxu0 %v152
    %175 = vmatprep.subr.mxu0 0.0
    %176 = vmatpush1.msra.mxu0 %v153
    %177 = vmatprep.subr.mxu0 0.0
    %178 = vmatpush1.msra.mxu0 %v154
    %179 = vmatprep.subr.mxu0 0.0
    %180 = vmatpush1.msra.mxu0 %v155
    %181 = vmatprep.subr.mxu0 0.0
    %182 = vmatpush1.msra.mxu0 %v156
    %183 = vmatprep.subr.mxu0 0.0
    %184 = vmatpush1.msra.mxu0 %v157
    %185 = vmatprep.subr.mxu0 0.0
    %186 = vmatpush1.msra.mxu0 %v158
    %187 = vmatprep.subr.mxu0 0.0
    %188 = vmatpush1.msra.mxu0 %v159
    %189 = vmatprep.subr.mxu0 0.0
    %190 = vmatpush1.msra.mxu0 %v160
    %191 = vmatprep.subr.mxu0 0.0
    %192 = vmatpush1.msra.mxu0 %v161
    %193 = vmatprep.subr.mxu0 0.0
    %194 = vmatpush1.msra.mxu0 %v162
    %195 = vmatprep.subr.mxu0 0.0
    %196 = vmatpush1.msra.mxu0 0.0
    %197 = vmatprep.subr.mxu0 0.0
    %198 = vmatpush1.msra.mxu0 0.0
    %199 = vmatprep.subr.mxu0 0.0
    %200 = vmatpush1.msra.mxu0 0.0
    %201 = vmatprep.subr.mxu0 0.0
    %202 = vmatpush1.msra.mxu0 0.0
    %203 = vmatprep.subr.mxu0 0.0
    %204 = vmatpush1.msra.mxu0 0.0
    %205 = vmatprep.subr.mxu0 0.0
    %206 = vmatpush1.msra.mxu0 0.0
    %207 = vmatprep.subr.mxu0 0.0
    %208 = vmatpush1.msra.mxu0 0.0
    %209 = vmatprep.subr.mxu0 0.0
    %210 = vmatpush1.msra.mxu0 0.0
    %211 = vmatprep.subr.mxu0 0.0
    %212 = vmatpush1.msra.mxu0 0.0
    %213 = vmatprep.subr.mxu0 0.0
    %214 = vmatpush1.msra.mxu0 0.0
    %215 = vmatprep.subr.mxu0 0.0
    %216 = vmatpush1.msra.mxu0 0.0
    %217 = vmatprep.subr.mxu0 0.0
    %218 = vmatpush1.msra.mxu0 0.0
    %219 = vmatprep.subr.mxu0 0.0
    %220 = vmatpush1.msra.mxu0 0.0
    %221 = vmatprep.subr.mxu0 0.0
    %222 = vmatpush1.msra.mxu0 0.0
    %223 = vmatprep.subr.mxu0 0.0
    %224 = vmatpush1.msra.mxu0 0.0
    %225 = vmatprep.subr.mxu0 0.0
    %226 = vmatpush1.msra.mxu0 0.0
    %227 = vmatprep.mubr.f32.mxu0 0.0
    %228 = vmatmul.mubr.f32.gmra.mrb[0].mxu0 %v145
    %v229 = vpop.f32.mrb[0].mxu0
    %v230 = vadd.f32 0.0, %v229
    %v231 = vpop.f32.mrb[0].mxu0
    %232 = vdwg.mxu0
    %v233 = vadd.f32 %v146, %v230
    %234 = vst [vmem:[#allocation2] sm:$0xff] %v233
    %v235 = vld [vmem:[#allocation2] sm:$0xff]
    %v236 = vld [vmem:[%s4] sm:$0x1]
    %v238 = vlaneseq
    %v239 = vshrl.u32 %v238, 7
    %v240 = vsub.s32 0, %v239
    %v241 = vrot.slane %v236, %v240
    %v243 = vadd.f32 %v235, %v241
    %244 = vst [vmem:[#allocation9] sm:$0xff] %v243
    // Predicated region
    $region34: #{mlp_encoder.1} parent=1 // pred_check
      _
    $region35: #{mlp_encoder.1} parent=1 // pred_check_branch
      %246 = sbr.rel (0) target = $region37
    $region36: #{mlp_encoder.1} parent=1 // pred_region
      %s248 = ssub.s32 128, 128
      %249 = vsyncadd [#allocation5], %s248
      %s251 = sshll.u32 [#allocation9], 4
      %s252 = int_to_ptr.vmem [resolvable:$true] %s251
      %254 = dma.vmem_to_hbm [thread:$0]  %s252, 128, %s5, [#allocation5]
    $region37: #{mlp_encoder.1} parent=1 // pred_fallthru
      _
    // Predicated region
    $region38: #{mlp_encoder.1} parent=1 // pred_check
      _
    $region39: #{mlp_encoder.1} parent=1 // pred_check_branch
      %256 = sbr.rel (0) target = $region41
    $region40: #{mlp_encoder.1} parent=1 // pred_region
      %257 = dma.done [#allocation5], 128
    $region41: #{mlp_encoder.1} parent=1 // pred_fallthru
      _
    %258 = vsyncpa [#allocation4], 1
    %259 = vsyncpa [#allocation7], 1
    %260 = vsyncpa [#allocation5], 1

</llo_original>
